<compile_context>
chip_gen: v6e
topology: v6e:2x2x1
jax: 0.10.0
libtpu: 0.0.40
codegen_flags: <defaults>
</compile_context>

<pallas_src>
import functools

import jax
import jax.numpy as jnp
from jax import lax
from jax.experimental import pallas as pl
from jax.experimental.pallas import tpu as pltpu


def _scan_matmul_kernel(tri_ref, x_ref, o_ref, carry_ref, *,
                        inclusive, split_f32, L, TL):
    # tri_ref: (TL, TL) bf16 lower-triangular ones (strict if exclusive)
    # x_ref / o_ref block: (1, TL, TN)
    # carry_ref: (1, TN) f32 running block-sum along the sequence axis
    k = pl.program_id(2)

    @pl.when(k == 0)
    def _():
        carry_ref[...] = jnp.zeros_like(carry_ref)

    x32 = x_ref[0].astype(jnp.float32)                   # (TL, TN)

    if L % TL != 0:
        # Last sequence chunk is partial: zero out the out-of-bounds rows so
        # stale VMEM contents can never pollute the matmul / carry.
        valid = L - k * TL
        row = lax.broadcasted_iota(jnp.int32, (TL, 1), 0)
        x32 = jnp.where(row < valid, x32, 0.0)

    tri = tri_ref[...]                                    # (TL, TL) bf16
    if split_f32:
        # Exact f32 matmul from three single-pass bf16 MXU matmuls: tri is
        # exact in bf16, and x_hi + x_mid + x_lo reproduces x to ~2^-27 |x|.
        x_hi = x32.astype(jnp.bfloat16)
        r = x32 - x_hi.astype(jnp.float32)
        x_mid = r.astype(jnp.bfloat16)
        r = r - x_mid.astype(jnp.float32)
        x_lo = r.astype(jnp.bfloat16)
        acc = jnp.dot(tri, x_hi, preferred_element_type=jnp.float32)
        acc = acc + jnp.dot(tri, x_mid, preferred_element_type=jnp.float32)
        acc = acc + jnp.dot(tri, x_lo, preferred_element_type=jnp.float32)
    else:
        # Narrow dtypes (e.g. bf16): a single pass already multiplies exactly.
        acc = jnp.dot(tri, x32.astype(jnp.bfloat16),
                      preferred_element_type=jnp.float32)

    y = carry_ref[...] + acc                              # (TL, TN), f32
    o_ref[0] = y.astype(o_ref.dtype)

    nxt = y[TL - 1:TL, :]
    if not inclusive:
        # exclusive scan: carry must still include the chunk's last element.
        nxt = nxt + x32[TL - 1:TL, :]
    carry_ref[...] = nxt


def _pick_feature_tile(DN: int) -> int:
    # Lane tile: a multiple of 128 when possible (lane-dense stores), as wide
    # as comfortably fits VMEM; else the full (legal) extent.
    if DN <= 1024 or DN % 128 != 0:
        return DN
    for tn in (1024, 768, 512, 384, 256, 128):
        if DN % tn == 0:
            return tn
    return DN


def blelloch_scan(x, inclusive=True, max_seq_tile=256):
    """Inclusive/exclusive prefix sum along axis 1 of x : (B, L, D, N)."""
    B, L, D, N = x.shape
    DN = D * N
    xf = x.reshape(B, L, DN)                 # free reshape, no data movement

    TL = L if L <= max_seq_tile else max_seq_tile
    K = pl.cdiv(L, TL)                       # sequence chunks (carried, sequential)
    TN = _pick_feature_tile(DN)
    J = DN // TN                             # independent lane tiles (parallel)

    idx = jnp.arange(TL, dtype=jnp.int32)
    if inclusive:
        tri = (idx[:, None] >= idx[None, :]).astype(jnp.bfloat16)
    else:
        tri = (idx[:, None] > idx[None, :]).astype(jnp.bfloat16)

    split_f32 = jnp.dtype(x.dtype) == jnp.float32
    passes = 3 if split_f32 else 1

    kernel = functools.partial(
        _scan_matmul_kernel,
        inclusive=inclusive, split_f32=split_f32, L=L, TL=TL)

    itemsize = jnp.dtype(x.dtype).itemsize
    cost = pl.CostEstimate(
        flops=int(2.0 * passes * B * (K * TL) * TL * DN),
        transcendentals=0,
        bytes_accessed=int(2 * B * L * DN * itemsize + TL * TL * 2),
    )

    out = pl.pallas_call(
        kernel,
        out_shape=jax.ShapeDtypeStruct((B, L, DN), x.dtype),
        grid_spec=pltpu.PrefetchScalarGridSpec(
            num_scalar_prefetch=0,
            grid=(B, J, K),
            in_specs=[
                pl.BlockSpec((TL, TL), lambda b, j, k: (0, 0)),        # tri (resident)
                pl.BlockSpec((1, TL, TN), lambda b, j, k: (b, k, j)),  # x
            ],
            out_specs=pl.BlockSpec((1, TL, TN), lambda b, j, k: (b, k, j)),
            scratch_shapes=[pltpu.VMEM((1, TN), jnp.float32)],         # carry
        ),
        compiler_params=pltpu.CompilerParams(
            dimension_semantics=("parallel", "parallel", "arbitrary"),
            vmem_limit_bytes=32 * 1024 * 1024,
        ),
        cost_estimate=cost,
    )(tri, xf)

    return out.reshape(B, L, D, N)


if __name__ == "__main__":
    k1, k2 = jax.random.split(jax.random.PRNGKey(0))

    # Small shape from the module spec (L=6: non-power-of-two, full-block path).
    B, L, D, N = 2, 6, 4, 16
    x = jax.random.normal(k1, (B, L, D, N), dtype=jnp.float32)

    y_inc = blelloch_scan(x, inclusive=True)
    jax.block_until_ready(y_inc)
    ref_inc = jnp.cumsum(x, axis=1)
    assert y_inc.shape == x.shape and y_inc.dtype == x.dtype
    assert jnp.allclose(y_inc, ref_inc, atol=1e-5, rtol=1e-5)

    y_exc = blelloch_scan(x, inclusive=False)
    jax.block_until_ready(y_exc)
    ref_exc = ref_inc - x
    assert jnp.allclose(y_exc, ref_exc, atol=1e-5, rtol=1e-5)

    # Larger shape exercising the carried sequence chunks (L=300 -> 256+44 with
    # in-kernel masking of the partial chunk) and a full-width 1024 lane tile.
    B2, L2, D2, N2 = 2, 300, 8, 128
    x2 = jax.random.normal(k2, (B2, L2, D2, N2), dtype=jnp.float32)
    y2 = blelloch_scan(x2, inclusive=True)
    jax.block_until_ready(y2)
    ref2 = jnp.cumsum(x2, axis=1)
    assert jnp.allclose(y2, ref2, atol=1e-4, rtol=1e-4)

    print("KERNEL_OK")
</pallas_src>

<mosaic_0001>
module attributes {stable_mosaic.version = 11 : i64} {
  func.func @_scan_matmul_kernel(%arg0: i32, %arg1: i32, %arg2: i32, %arg3: memref<6x6xbf16, #tpu.memory_space<vmem>>, %arg4: memref<1x6x64xf32, #tpu.memory_space<vmem>>, %arg5: memref<1x6x64xf32, #tpu.memory_space<vmem>>, %arg6: memref<1x64xf32, #tpu.memory_space<vmem>>) attributes {dimension_semantics = [#tpu.dimension_semantics<parallel>, #tpu.dimension_semantics<parallel>, #tpu.dimension_semantics<arbitrary>], iteration_bounds = array<i64: 2, 1, 1>, scalar_prefetch = 0 : i64, scratch_operands = 1 : i64, tpu.core_type = #tpu.core_type<tc>, window_params = [{pipeline_mode = #tpu.pipeline_mode<synchronous>, transform_indices = @transform_0, window_bounds = array<i64: 6, 6>}, {transform_indices = @transform_1, window_bounds = array<i64: 1, 6, 64>}, {transform_indices = @transform_2, window_bounds = array<i64: 1, 6, 64>}]} {
    %c0_i32 = arith.constant 0 : i32
    %0 = arith.cmpi eq, %arg2, %c0_i32 : i32
    %1 = arith.extui %0 : i1 to i32
    %c0_i32_0 = arith.constant 0 : i32
    %2 = arith.cmpi ne, %1, %c0_i32_0 : i32
    scf.if %2 {
      %cst_14 = arith.constant 0.000000e+00 : f32
      %26 = vector.broadcast %cst_14 : f32 to vector<1x64xf32>
      %c0_15 = arith.constant 0 : index
      %c0_16 = arith.constant 0 : index
      %27 = vector.load %arg6[%c0_15, %c0_16] : memref<1x64xf32, #tpu.memory_space<vmem>>, vector<1x64xf32>
      tpu.vector_store %arg6[%c0_15, %c0_16], %26 {strides = array<i32>} : memref<1x64xf32, #tpu.memory_space<vmem>>, vector<1x64xf32>,
    } else {
    }
    %c0 = arith.constant 0 : index
    %c0_1 = arith.constant 0 : index
    %c0_2 = arith.constant 0 : index
    %3 = vector.load %arg4[%c0, %c0_1, %c0_2] : memref<1x6x64xf32, #tpu.memory_space<vmem>>, vector<1x6x64xf32>
    %4 = vector.shape_cast %3 : vector<1x6x64xf32> to vector<6x64xf32>
    %c0_3 = arith.constant 0 : index
    %c0_4 = arith.constant 0 : index
    %5 = vector.load %arg3[%c0_3, %c0_4] : memref<6x6xbf16, #tpu.memory_space<vmem>>, vector<6x6xbf16>
    %6 = arith.truncf %4 : vector<6x64xf32> to vector<6x64xbf16>
    %7 = arith.extf %6 : vector<6x64xbf16> to vector<6x64xf32>
    %8 = arith.subf %4, %7 : vector<6x64xf32>
    %9 = arith.truncf %8 : vector<6x64xf32> to vector<6x64xbf16>
    %10 = arith.extf %9 : vector<6x64xbf16> to vector<6x64xf32>
    %11 = arith.subf %8, %10 : vector<6x64xf32>
    %12 = arith.truncf %11 : vector<6x64xf32> to vector<6x64xbf16>
    %cst = arith.constant dense<0.000000e+00> : vector<6x64xf32>
    %13 = tpu.matmul %5, %6, %cst {dimension_numbers = #tpu.dot_dimension_numbers<[1], [0], [0], [1], [0, 0, 1, 1], [], []>} : vector<6x6xbf16>, vector<6x64xbf16>, vector<6x64xf32> -> vector<6x64xf32>
    %cst_5 = arith.constant dense<0.000000e+00> : vector<6x64xf32>
    %14 = tpu.matmul %5, %9, %cst_5 {dimension_numbers = #tpu.dot_dimension_numbers<[1], [0], [0], [1], [0, 0, 1, 1], [], []>} : vector<6x6xbf16>, vector<6x64xbf16>, vector<6x64xf32> -> vector<6x64xf32>
    %15 = arith.addf %13, %14 : vector<6x64xf32>
    %cst_6 = arith.constant dense<0.000000e+00> : vector<6x64xf32>
    %16 = tpu.matmul %5, %12, %cst_6 {dimension_numbers = #tpu.dot_dimension_numbers<[1], [0], [0], [1], [0, 0, 1, 1], [], []>} : vector<6x6xbf16>, vector<6x64xbf16>, vector<6x64xf32> -> vector<6x64xf32>
    %17 = arith.addf %15, %16 : vector<6x64xf32>
    %c0_7 = arith.constant 0 : index
    %c0_8 = arith.constant 0 : index
    %18 = vector.load %arg6[%c0_7, %c0_8] : memref<1x64xf32, #tpu.memory_space<vmem>>, vector<1x64xf32>
    %19 = vector.broadcast %18 : vector<1x64xf32> to vector<6x64xf32>
    %20 = arith.addf %19, %17 : vector<6x64xf32>
    %c0_9 = arith.constant 0 : index
    %c0_10 = arith.constant 0 : index
    %c0_11 = arith.constant 0 : index
    %21 = vector.load %arg5[%c0_9, %c0_10, %c0_11] : memref<1x6x64xf32, #tpu.memory_space<vmem>>, vector<1x6x64xf32>
    %22 = vector.shape_cast %21 : vector<1x6x64xf32> to vector<6x64xf32>
    %23 = vector.shape_cast %20 : vector<6x64xf32> to vector<1x6x64xf32>
    tpu.vector_store %arg5[%c0_9, %c0_10, %c0_11], %23 {strides = array<i32>} : memref<1x6x64xf32, #tpu.memory_space<vmem>>, vector<1x6x64xf32>,
    %24 = vector.extract_strided_slice %20 {offsets = [5, 0], sizes = [1, 64], strides = [1, 1]} : vector<6x64xf32> to vector<1x64xf32>
    %c0_12 = arith.constant 0 : index
    %c0_13 = arith.constant 0 : index
    %25 = vector.load %arg6[%c0_12, %c0_13] : memref<1x64xf32, #tpu.memory_space<vmem>>, vector<1x64xf32>
    tpu.vector_store %arg6[%c0_12, %c0_13], %24 {strides = array<i32>} : memref<1x64xf32, #tpu.memory_space<vmem>>, vector<1x64xf32>,
    return
  }
  func.func @transform_0(%arg0: i32, %arg1: i32, %arg2: i32) -> (i32, i32) {
    %c0_i32 = arith.constant 0 : i32
    %c0_i32_0 = arith.constant 0 : i32
    %c0_i32_1 = arith.constant 0 : i32
    return %c0_i32, %c0_i32_0 : i32, i32
  }
  func.func @transform_1(%arg0: i32, %arg1: i32, %arg2: i32) -> (i32, i32, i32) {
    %c0_i32 = arith.constant 0 : i32
    return %arg0, %arg2, %arg1 : i32, i32, i32
  }
  func.func @transform_2(%arg0: i32, %arg1: i32, %arg2: i32) -> (i32, i32, i32) {
    %c0_i32 = arith.constant 0 : i32
    return %arg0, %arg2, %arg1 : i32, i32, i32
  }
}

</mosaic_0001>

<llo_original>
// kernel: tpu_custom_call.1
$region0: #{tpu_custom_call.1}
  #allocation0 [shape = 'u32[]', space=smem, size = 0x4, offset = 0x4, fixed_abs, tag = 'smem constant byte address 0x4 - core index']
  #allocation1 [shape = 'u32[144,128]{1,0:T(1,128)}', space=vmem, size = 0x12000, scoped, tag = 'internal scratch']
  #allocation2 [shape = 'f32[1,64]{1,0:T(1,128)}', space=vmem, size = 0x200, scoped, tag = 'scratch operand']
  %s0 = inlined_call_operand.vmem [shape: bf16[6,6], index: 0, kind: input, shape index: {}]
  %s1 = inlined_call_operand.vmem [shape: f32[2,6,64], index: 1, kind: input, shape index: {}]
  %s2 = inlined_call_operand.vmem [shape: f32[2,6,64], index: 2, kind: output, shape index: {}]
  %s3 = sld [smem:[#allocation0]]
  $region45: #{tpu_custom_call.1} parent=0
    _
  %s5 = ssub.s32 1, %s3
  %s6 = scalar_select 0, %s5, %s3
  loop: start=0, step=1, limit=4
  $region2: #{tpu_custom_call.1} parent=0 // loop_pre_header
    _
  $region3: #{tpu_custom_call.1} parent=0 // loop_header
    %s8 = sphi 0, %s12
    %p9 = scmp.ge.s32.totalorder %s8, 4
    %s15 = sphi 0, %s34
    %s16 = sphi 0, %s30
    %s17 = sphi 0, %s26
    %s18 = sphi 0, %s15
    %s19 = sphi 0, %s16
    %s20 = sphi 0, %s17
    %s21 = sphi 0, %s18
    %s22 = sphi 0, %s19
    %s23 = sphi 0, %s20
    %s35 = sphi 0, %s35
    %s37 = sphi 0, %s35
    %s38 = sphi 0, %s37
    %s52 = sphi 0, %s38
    %s62 = sphi 0, %s64
    %s65 = sphi 0, %s62
    %s66 = sphi 0, %s65
    %s82 = sphi 0, %s66
    %s92 = sphi 0, %s94
    %s95 = sphi 0, %s92
    %s96 = sphi 0, %s95
    %s112 = sphi 0, %s96
  $region4: #{tpu_custom_call.1} parent=0 // loop_header_branch
    %11 = sbr.rel (%p9) target = $region8
  $region5: #{tpu_custom_call.1} parent=0 // loop_body
    %s13 = ssub.s32 %s8, 1
    %s14 = ssub.s32 %s8, 2
    %s24 = sadd.s32 1, %s17
    %p25 = scmp.ge.s32.totalorder %s24, 1
    %s26 = scalar_select %p25, 0, %s24
    %s27 = sadd.s32 1, %s16
    %s28 = scalar_select %p25, %s27, %s16
    %p29 = scmp.ge.s32.totalorder %s28, 1
    %s30 = scalar_select %p29, 0, %s28
    %s31 = sadd.s32 1, %s15
    %s32 = scalar_select %p29, %s31, %s15
    %p33 = scmp.ge.s32.totalorder %s32, 2
    %s34 = scalar_select %p33, 0, %s32
    %s36 = sadd.s32 %s35, 1
    %p39 = scmp.eq.s32.totalorder %s8, 1
    %p40 = scmp.ne.s32.totalorder %s35, %s37
    %p41 = scmp.eq.s32.totalorder %s8, 0
    %p42 = por %p40, %p41
    %p43 = scmp.ne.s32.totalorder %s35, %s37
    %p44 = scmp.eq.s32.totalorder %s13, 1
    %p45 = por %p43, %p44
    %p46 = scmp.ne.s32.totalorder %s37, %s38
    %p47 = scmp.eq.s32.totalorder %s13, 0
    %p48 = por %p46, %p47
    %p49 = scmp.ne.s32.totalorder %s37, %s38
    %p50 = scmp.eq.s32.totalorder %s14, 1
    %p51 = por %p49, %p50
    %p53 = scmp.ne.s32.totalorder %s38, %s52
    %p54 = scmp.eq.s32.totalorder %s14, 0
    %p55 = por %p53, %p54
    %s56 = ssub.s32 %s15, %s34
    %s57 = ssub.s32 %s17, %s26
    %s58 = sor.u32 %s56, %s57
    %s59 = ssub.s32 %s16, %s30
    %s60 = sor.u32 %s58, %s59
    %p61 = scmp.eq.s32.totalorder %s60, 0
    %s63 = sadd.s32 %s62, 1
    %s64 = scalar_select %p61, %s62, %s63
    %p67 = pneg %p61
    %p68 = scmp.eq.s32.totalorder %s8, 1
    %p69 = por %p67, %p68
    %p70 = scmp.ne.s32.totalorder %s62, %s65
    %p71 = scmp.eq.s32.totalorder %s8, 0
    %p72 = por %p70, %p71
    %p73 = scmp.ne.s32.totalorder %s62, %s65
    %p74 = scmp.eq.s32.totalorder %s13, 1
    %p75 = por %p73, %p74
    %p76 = scmp.ne.s32.totalorder %s65, %s66
    %p77 = scmp.eq.s32.totalorder %s13, 0
    %p78 = por %p76, %p77
    %p79 = scmp.ne.s32.totalorder %s65, %s66
    %p80 = scmp.eq.s32.totalorder %s14, 1
    %p81 = por %p79, %p80
    %p83 = scmp.ne.s32.totalorder %s66, %s82
    %p84 = scmp.eq.s32.totalorder %s14, 0
    %p85 = por %p83, %p84
    %s86 = ssub.s32 %s15, %s34
    %s87 = ssub.s32 %s17, %s26
    %s88 = sor.u32 %s86, %s87
    %s89 = ssub.s32 %s16, %s30
    %s90 = sor.u32 %s88, %s89
    %p91 = scmp.eq.s32.totalorder %s90, 0
    %s93 = sadd.s32 %s92, 1
    %s94 = scalar_select %p91, %s92, %s93
    %p97 = pneg %p91
    %p98 = scmp.eq.s32.totalorder %s8, 1
    %p99 = por %p97, %p98
    %p100 = scmp.ne.s32.totalorder %s92, %s95
    %p101 = scmp.eq.s32.totalorder %s8, 0
    %p102 = por %p100, %p101
    %p103 = scmp.ne.s32.totalorder %s92, %s95
    %p104 = scmp.eq.s32.totalorder %s13, 1
    %p105 = por %p103, %p104
    %p106 = scmp.ne.s32.totalorder %s95, %s96
    %p107 = scmp.eq.s32.totalorder %s13, 0
    %p108 = por %p106, %p107
    %p109 = scmp.ne.s32.totalorder %s95, %s96
    %p110 = scmp.eq.s32.totalorder %s14, 1
    %p111 = por %p109, %p110
    %p113 = scmp.ne.s32.totalorder %s96, %s112
    %p114 = scmp.eq.s32.totalorder %s14, 0
    %p115 = por %p113, %p114
    %p116 = scmp.le.s32.totalorder 1, %s8
    %p117 = scmp.lt.s32.totalorder %s8, 3
    %p118 = pnand %p116, %p117
    %p119 = pneg %p118
    // Predicated region
    $region9: #{tpu_custom_call.1} parent=5 // pred_check
      _
    $region10: #{tpu_custom_call.1} parent=5 // pred_check_branch
      %121 = sbr.rel (%p118) target = $region12
    $region11: #{tpu_custom_call.1} parent=5 // pred_region
      %s122 = ssub.s32 %s8, 1
      // Predicated region
      $region13: #{tpu_custom_call.1} parent=11 // pred_check
        %p123 = pneg %p48
      $region14: #{tpu_custom_call.1} parent=11 // pred_check_branch
        %125 = sbr.rel (%p123) target = $region16
      $region15: #{tpu_custom_call.1} parent=11 // pred_region
        _
      $region16: #{tpu_custom_call.1} parent=11 // pred_fallthru
        _
    $region12: #{tpu_custom_call.1} parent=5 // pred_fallthru
      _
    %p126 = scmp.lt.s32.totalorder %s8, 2
    // Predicated region
    $region17: #{tpu_custom_call.1} parent=5 // pred_check
      %p127 = pneg %p126
    $region18: #{tpu_custom_call.1} parent=5 // pred_check_branch
      %129 = sbr.rel (%p127) target = $region20
    $region19: #{tpu_custom_call.1} parent=5 // pred_region
      // Predicated region
      $region21: #{tpu_custom_call.1} parent=19 // pred_check
        %p130 = pneg %p72
      $region22: #{tpu_custom_call.1} parent=19 // pred_check_branch
        %132 = sbr.rel (%p130) target = $region24
      $region23: #{tpu_custom_call.1} parent=19 // pred_region
        %p133 = scmp.lt.s32.totalorder %s15, 1
        %s134 = scalar_select %p133, %s15, 1
        %p135 = scmp.lt.s32.totalorder %s17, 0
        %s136 = scalar_select %p135, %s17, 0
        %p137 = scmp.lt.s32.totalorder %s16, 0
        %s138 = scalar_select %p137, %s16, 0
        %s139 = sadd.s32 %s138, %s136
        %s140 = sadd.s32 %s139, %s134
        %s141 = smul.addr %s140, 8
        %s142 = scalar_lea.vmem %s1, %s141
      $region24: #{tpu_custom_call.1} parent=19 // pred_fallthru
        _
    $region20: #{tpu_custom_call.1} parent=5 // pred_fallthru
      _
    %p143 = scmp.le.s32.totalorder 1, %s8
    %p144 = scmp.lt.s32.totalorder %s8, 3
    %p145 = pnand %p143, %p144
    %p146 = pneg %p145
    // Predicated region
    $region25: #{tpu_custom_call.1} parent=5 // pred_check
      _
    $region26: #{tpu_custom_call.1} parent=5 // pred_check_branch
      %148 = sbr.rel (%p145) target = $region28
    $region27: #{tpu_custom_call.1} parent=5 // pred_region
      %s149 = ssub.s32 %s8, 1
      %p150 = pneg %p48
      %p151 = pneg %p45
      %p152 = scmp.lt.s32.totalorder %s18, 1
      %s153 = scalar_select %p152, %s18, 1
      %p154 = scmp.lt.s32.totalorder %s20, 0
      %s155 = scalar_select %p154, %s20, 0
      %p156 = scmp.lt.s32.totalorder %s19, 0
      %s157 = scalar_select %p156, %s19, 0
      %s158 = sadd.s32 %s157, %s155
      %s159 = sadd.s32 %s158, %s153
      %s160 = smul.addr %s159, 8
      %s161 = scalar_lea.vmem %s1, %s160
      %p162 = pneg %p78
      %p163 = pneg %p75
      %p164 = pneg %p108
      %p165 = pneg %p105
      %p166 = scmp.lt.s32.totalorder %s18, 1
      %s167 = scalar_select %p166, %s18, 1
      %p168 = scmp.lt.s32.totalorder %s20, 0
      %s169 = scalar_select %p168, %s20, 0
      %p170 = scmp.lt.s32.totalorder %s19, 0
      %s171 = scalar_select %p170, %s19, 0
      %s172 = sadd.s32 %s171, %s169
      %s173 = sadd.s32 %s172, %s167
      %s174 = smul.addr %s173, 8
      %s175 = scalar_lea.vmem %s2, %s174
      %p176 = scmp.lt.s32.totalorder %s18, 1
      %s177 = scalar_select %p176, %s18, 1
      %p178 = scmp.lt.s32.totalorder %s20, 0
      %s179 = scalar_select %p178, %s20, 0
      %p180 = scmp.lt.s32.totalorder %s19, 0
      %s181 = scalar_select %p180, %s19, 0
      %s182 = sadd.s32 %s181, %s179
      %s183 = sadd.s32 %s182, %s177
      %s184 = smul.addr %s183, 8
      %s185 = scalar_lea.vmem %s1, %s184
      %p186 = scmp.lt.s32.totalorder %s18, 1
      %s187 = scalar_select %p186, %s18, 1
      %p188 = scmp.lt.s32.totalorder %s20, 0
      %s189 = scalar_select %p188, %s20, 0
      %p190 = scmp.lt.s32.totalorder %s19, 0
      %s191 = scalar_select %p190, %s19, 0
      %s192 = sadd.s32 %s191, %s189
      %s193 = sadd.s32 %s192, %s187
      %s194 = smul.addr %s193, 8
      %s195 = scalar_lea.vmem %s2, %s194
      %p197 = scmp.eq.s32.totalorder %s20, 0
      // Predicated region
      $region29: #{tpu_custom_call.1} parent=27 // pred_check
        %p198 = pneg %p197
      $region30: #{tpu_custom_call.1} parent=27 // pred_check_branch
        %200 = sbr.rel (%p198) target = $region32
      $region31: #{tpu_custom_call.1} parent=27 // pred_region
        %vm201 = vcmask 516096
        %202 = vst.msk [vmem:[#allocation2] sm:$0x1] %vm201, 0.0
      $region32: #{tpu_custom_call.1} parent=27 // pred_fallthru
        _
      %v203 = vld [vmem:[%s185] sm:$0x3f]
      %v204 = vld [vmem:[%s0] sm:$0x7]
      %v205 = vpack.c.bf16 %v203, %v203
      %v206 = vunpack.c.l.bf16 %v205
      %v207 = vsub.f32 %v203, %v206
      %v208 = vpack.c.bf16 %v207, %v207
      %v209 = vunpack.c.l.bf16 %v208
      %v210 = vsub.f32 %v207, %v209
      %v211 = vpack.c.bf16 %v210, %v210
      %vm212 = vcmask 48128
      %v214 = vsel %vm212, %v204, 0
      %vm216 = vcmask 1042432
      %v218 = vsel %vm216, %v208, 0
      %220 = vmatprep.subr.bf16.mxu0 0
      %221 = vmatpush1.bf16.msra.mxu0 0
      %222 = vmatprep.subr.bf16.mxu0 0
      %223 = vmatpush1.bf16.msra.mxu0 0
      %224 = vmatprep.subr.bf16.mxu0 0
      %225 = vmatpush1.bf16.msra.mxu0 0
      %226 = vmatprep.subr.bf16.mxu0 0
      %227 = vmatpush1.bf16.msra.mxu0 0
      %228 = vmatprep.subr.bf16.mxu0 0
      %229 = vmatpush1.bf16.msra.mxu0 0
      %230 = vmatprep.subr.bf16.mxu0 0
      %231 = vmatpush1.bf16.msra.mxu0 0
      %232 = vmatprep.subr.bf16.mxu0 0
      %233 = vmatpush1.bf16.msra.mxu0 0
      %234 = vmatprep.subr.bf16.mxu0 0
      %235 = vmatpush1.bf16.msra.mxu0 %v218
      %236 = vmatprep.subr.bf16.mxu0 0
      %237 = vmatpush2.bf16.msra.mxu0 0
      %238 = vmatprep.subr.bf16.mxu0 0
      %239 = vmatpush2.bf16.msra.mxu0 0
      %240 = vmatprep.subr.bf16.mxu0 0
      %241 = vmatpush2.bf16.msra.mxu0 0
      %242 = vmatprep.subr.bf16.mxu0 0
      %243 = vmatpush2.bf16.msra.mxu0 0
      %244 = vmatprep.subr.bf16.mxu0 0
      %245 = vmatpush2.bf16.msra.mxu0 0
      %246 = vmatprep.subr.bf16.mxu0 0
      %247 = vmatpush2.bf16.msra.mxu0 0
      %248 = vmatprep.subr.bf16.mxu0 0
      %249 = vmatpush2.bf16.msra.mxu0 0
      %250 = vmatprep.subr.bf16.mxu0 0
      %251 = vmatpush2.bf16.msra.mxu0 0
      %252 = vmatprep.mubr.bf16.mxu0 0
      %253 = vmatmul.mubr.bf16.gmra.mxu0 %v214
      %v254 = vpop.f32.mrf.mxu0
      %v255 = vadd.f32 0.0, %v254
      %v256 = vpop.f32.mrf.mxu0
      %v257 = vpop.f32.mrf.mxu0
      %v258 = vpop.f32.mrf.mxu0
      %259 = vdwg.mxu0
      %v261 = vsel %vm216, %v205, 0
      %263 = vmatprep.subr.bf16.mxu0 0
      %264 = vmatpush1.bf16.msra.mxu0 0
      %265 = vmatprep.subr.bf16.mxu0 0
      %266 = vmatpush1.bf16.msra.mxu0 0
      %267 = vmatprep.subr.bf16.mxu0 0
      %268 = vmatpush1.bf16.msra.mxu0 0
      %269 = vmatprep.subr.bf16.mxu0 0
      %270 = vmatpush1.bf16.msra.mxu0 0
      %271 = vmatprep.subr.bf16.mxu0 0
      %272 = vmatpush1.bf16.msra.mxu0 0
      %273 = vmatprep.subr.bf16.mxu0 0
      %274 = vmatpush1.bf16.msra.mxu0 0
      %275 = vmatprep.subr.bf16.mxu0 0
      %276 = vmatpush1.bf16.msra.mxu0 0
      %277 = vmatprep.subr.bf16.mxu0 0
      %278 = vmatpush1.bf16.msra.mxu0 %v261
      %279 = vmatprep.subr.bf16.mxu0 0
      %280 = vmatpush2.bf16.msra.mxu0 0
      %281 = vmatprep.subr.bf16.mxu0 0
      %282 = vmatpush2.bf16.msra.mxu0 0
      %283 = vmatprep.subr.bf16.mxu0 0
      %284 = vmatpush2.bf16.msra.mxu0 0
      %285 = vmatprep.subr.bf16.mxu0 0
      %286 = vmatpush2.bf16.msra.mxu0 0
      %287 = vmatprep.subr.bf16.mxu0 0
      %288 = vmatpush2.bf16.msra.mxu0 0
      %289 = vmatprep.subr.bf16.mxu0 0
      %290 = vmatpush2.bf16.msra.mxu0 0
      %291 = vmatprep.subr.bf16.mxu0 0
      %292 = vmatpush2.bf16.msra.mxu0 0
      %293 = vmatprep.subr.bf16.mxu0 0
      %294 = vmatpush2.bf16.msra.mxu0 0
      %295 = vmatprep.mubr.bf16.mxu0 0
      %296 = vmatmul.mubr.bf16.gmra.mxu0 %v214
      %v297 = vpop.f32.mrf.mxu0
      %v298 = vadd.f32 %v255, %v297
      %v299 = vpop.f32.mrf.mxu0
      %v300 = vpop.f32.mrf.mxu0
      %v301 = vpop.f32.mrf.mxu0
      %302 = vdwg.mxu0
      %v304 = vsel %vm216, %v211, 0
      %306 = vmatprep.subr.bf16.mxu0 0
      %307 = vmatpush1.bf16.msra.mxu0 0
      %308 = vmatprep.subr.bf16.mxu0 0
      %309 = vmatpush1.bf16.msra.mxu0 0
      %310 = vmatprep.subr.bf16.mxu0 0
      %311 = vmatpush1.bf16.msra.mxu0 0
      %312 = vmatprep.subr.bf16.mxu0 0
      %313 = vmatpush1.bf16.msra.mxu0 0
      %314 = vmatprep.subr.bf16.mxu0 0
      %315 = vmatpush1.bf16.msra.mxu0 0
      %316 = vmatprep.subr.bf16.mxu0 0
      %317 = vmatpush1.bf16.msra.mxu0 0
      %318 = vmatprep.subr.bf16.mxu0 0
      %319 = vmatpush1.bf16.msra.mxu0 0
      %320 = vmatprep.subr.bf16.mxu0 0
      %321 = vmatpush1.bf16.msra.mxu0 %v304
      %322 = vmatprep.subr.bf16.mxu0 0
      %323 = vmatpush2.bf16.msra.mxu0 0
      %324 = vmatprep.subr.bf16.mxu0 0
      %325 = vmatpush2.bf16.msra.mxu0 0
      %326 = vmatprep.subr.bf16.mxu0 0
      %327 = vmatpush2.bf16.msra.mxu0 0
      %328 = vmatprep.subr.bf16.mxu0 0
      %329 = vmatpush2.bf16.msra.mxu0 0
      %330 = vmatprep.subr.bf16.mxu0 0
      %331 = vmatpush2.bf16.msra.mxu0 0
      %332 = vmatprep.subr.bf16.mxu0 0
      %333 = vmatpush2.bf16.msra.mxu0 0
      %334 = vmatprep.subr.bf16.mxu0 0
      %335 = vmatpush2.bf16.msra.mxu0 0
      %336 = vmatprep.subr.bf16.mxu0 0
      %337 = vmatpush2.bf16.msra.mxu0 0
      %338 = vmatprep.mubr.bf16.mxu0 0
      %339 = vmatmul.mubr.bf16.gmra.mxu0 %v214
      %v340 = vpop.f32.mrf.mxu0
      %v341 = vadd.f32 0.0, %v340
      %v342 = vpop.f32.mrf.mxu0
      %v343 = vpop.f32.mrf.mxu0
      %v344 = vpop.f32.mrf.mxu0
      %345 = vdwg.mxu0
      %v346 = vadd.f32 %v298, %v341
      %v347 = vld [vmem:[#allocation2] sm:$0x1]
      %v349 = vlaneseq
      %v350 = vshrl.u32 %v349, 7
      %v351 = vsub.s32 0, %v350
      %v352 = vrot.slane %v347, %v351
      %v354 = vadd.f32 %v352, %v346
      %vm355 = vcmask 521216
      %356 = vst.msk [vmem:[%s195] sm:$0x3f] %vm355, %v354
      %vm357 = vcmask 521221
      %358 = vst.msk [vmem:[#allocation2 - $0x5] sm:$0x20] %vm357, %v354
      %p359 = scmp.lt.s32.totalorder %s18, 1
      %s360 = scalar_select %p359, %s18, 1
      %p361 = scmp.lt.s32.totalorder %s20, 0
      %s362 = scalar_select %p361, %s20, 0
      %p363 = scmp.lt.s32.totalorder %s19, 0
      %s364 = scalar_select %p363, %s19, 0
      %s365 = sadd.s32 %s364, %s362
      %s366 = sadd.s32 %s365, %s360
      %s367 = smul.addr %s366, 8
      %s368 = scalar_lea.vmem %s2, %s367
      // Predicated region
      $region33: #{tpu_custom_call.1} parent=27 // pred_check
        %p369 = pneg %p105
      $region34: #{tpu_custom_call.1} parent=27 // pred_check_branch
        %371 = sbr.rel (%p369) target = $region36
      $region35: #{tpu_custom_call.1} parent=27 // pred_region
        _
      $region36: #{tpu_custom_call.1} parent=27 // pred_fallthru
        _
    $region28: #{tpu_custom_call.1} parent=5 // pred_fallthru
      _
    %p372 = scmp.le.s32.totalorder 2, %s8
    // Predicated region
    $region37: #{tpu_custom_call.1} parent=5 // pred_check
      %p373 = pneg %p372
    $region38: #{tpu_custom_call.1} parent=5 // pred_check_branch
      %375 = sbr.rel (%p373) target = $region40
    $region39: #{tpu_custom_call.1} parent=5 // pred_region
      %s376 = ssub.s32 %s8, 2
      // Predicated region
      $region41: #{tpu_custom_call.1} parent=39 // pred_check
        %p377 = pneg %p111
      $region42: #{tpu_custom_call.1} parent=39 // pred_check_branch
        %379 = sbr.rel (%p377) target = $region44
      $region43: #{tpu_custom_call.1} parent=39 // pred_region
        %p380 = scmp.lt.s32.totalorder %s21, 1
        %s381 = scalar_select %p380, %s21, 1
        %p382 = scmp.lt.s32.totalorder %s23, 0
        %s383 = scalar_select %p382, %s23, 0
        %p384 = scmp.lt.s32.totalorder %s22, 0
        %s385 = scalar_select %p384, %s22, 0
        %s386 = sadd.s32 %s385, %s383
        %s387 = sadd.s32 %s386, %s381
        %s388 = smul.addr %s387, 8
        %s389 = scalar_lea.vmem %s2, %s388
      $region44: #{tpu_custom_call.1} parent=39 // pred_fallthru
        _
    $region40: #{tpu_custom_call.1} parent=5 // pred_fallthru
      _
  $region6: #{tpu_custom_call.1} parent=0 // loop_footer
    %s12 = sadd.s32 1, %s8
  $region7: #{tpu_custom_call.1} parent=0 // loop_footer_branch
    %7 = sbr.rel target = $region3
  $region8: #{tpu_custom_call.1} parent=0 // loop_exit
    _

</llo_original>
